<compile_context>
chip_gen: v7x
topology: tpu7x:2x2x1
jax: 0.10.0
libtpu: 0.0.40
codegen_flags: <defaults>
</compile_context>

<pallas_src>
import functools

import jax
import jax.numpy as jnp
from jax.experimental import pallas as pl
from jax.experimental.pallas import tpu as pltpu


def _round_up(x, m):
    return ((x + m - 1) // m) * m


def _encoder_block_kernel(x_ref, w_ref, b_ref, *rest, negative_slope,
                          keep_threshold, inv_keep_rate, apply_dropout,
                          use_bf16):
    if apply_dropout:
        r_ref, o_ref = rest
    else:
        (o_ref,) = rest

    # ---- Linear: y = x @ W_t + b  (MXU matmul, f32 accumulation) ----
    x = x_ref[...]
    w = w_ref[...]
    if use_bf16:
        x = x.astype(jnp.bfloat16)
        w = w.astype(jnp.bfloat16)
    y = jnp.dot(x, w, preferred_element_type=jnp.float32)
    y = y + b_ref[...].astype(jnp.float32)

    # ---- LeakyReLU(negative_slope) ----
    y = jnp.where(y >= 0.0, y, negative_slope * y)

    # ---- Dropout(p): integer-threshold compare + single select ----
    if apply_dropout:
        keep = r_ref[...] >= jnp.uint32(keep_threshold)
        y = jnp.where(keep, y * inv_keep_rate, 0.0)

    o_ref[...] = y.astype(o_ref.dtype)


def encoder_block(x, w_t, b, *, drop_rate, rng_key=None, training=True,
                  negative_slope=0.2, block_m_cap=512, use_bf16=False):
    """Pallas EncoderBlock forward.

    x:   (batch, in_dim)   float32
    w_t: (in_dim, out_dim) float32   (transpose of PyTorch Linear.weight)
    b:   (out_dim,)        float32
    """
    batch, in_dim = x.shape
    in_dim_w, out_dim = w_t.shape
    assert in_dim == in_dim_w

    apply_dropout = bool(training) and float(drop_rate) > 0.0
    if apply_dropout and rng_key is None:
        rng_key = jax.random.PRNGKey(0)

    # --- pad feature dims to lane multiples (128) for dense loads/stores ---
    in_pad = _round_up(in_dim, 128)
    out_pad = _round_up(out_dim, 128)

    # --- choose a large M tile; single grid step for small batches ---
    block_m = min(_round_up(batch, 8), int(block_m_cap))
    m_pad = _round_up(batch, block_m)
    grid_m = m_pad // block_m

    xp = jnp.pad(x, ((0, m_pad - batch), (0, in_pad - in_dim)))
    wp = jnp.pad(w_t, ((0, in_pad - in_dim), (0, out_pad - out_dim)))
    bp = jnp.pad(b, (0, out_pad - out_dim)).reshape(1, out_pad)

    # Dropout threshold: drop iff bits < p * 2^32  (keep prob = 1 - p).
    keep_threshold = min(int(round(float(drop_rate) * (1 << 32))), (1 << 32) - 1)
    inv_keep_rate = 1.0 / (1.0 - float(drop_rate)) if apply_dropout else 1.0

    kernel = functools.partial(
        _encoder_block_kernel,
        negative_slope=float(negative_slope),
        keep_threshold=keep_threshold,
        inv_keep_rate=inv_keep_rate,
        apply_dropout=apply_dropout,
        use_bf16=bool(use_bf16),
    )

    in_specs = [
        pl.BlockSpec((block_m, in_pad), lambda i: (i, 0)),    # x tile
        pl.BlockSpec((in_pad, out_pad), lambda i: (0, 0)),    # full W_t (resident)
        pl.BlockSpec((1, out_pad), lambda i: (0, 0)),         # bias
    ]
    operands = [xp, wp, bp]
    if apply_dropout:
        bits = jax.random.bits(rng_key, (m_pad, out_pad), dtype=jnp.uint32)
        in_specs.append(pl.BlockSpec((block_m, out_pad), lambda i: (i, 0)))
        operands.append(bits)

    # VMEM budget: double-buffered tiles + resident weight/bias, with headroom.
    bytes_per_elem = 4
    tile_bytes = (block_m * in_pad + block_m * out_pad * (2 if apply_dropout else 1)
                  ) * bytes_per_elem
    resident_bytes = (in_pad * out_pad + out_pad) * bytes_per_elem
    vmem_need = 2 * (2 * tile_bytes + resident_bytes) + (1 << 20)
    vmem_limit = int(min(max(vmem_need, 16 << 20), 64 << 20))

    cost = pl.CostEstimate(
        flops=2 * m_pad * in_pad * out_pad,
        transcendentals=0,
        bytes_accessed=(m_pad * in_pad + in_pad * out_pad + out_pad
                        + m_pad * out_pad * (2 if apply_dropout else 1)
                        ) * bytes_per_elem,
    )

    out_padded = pl.pallas_call(
        kernel,
        out_shape=jax.ShapeDtypeStruct((m_pad, out_pad), x.dtype),
        grid=(grid_m,),
        in_specs=in_specs,
        out_specs=pl.BlockSpec((block_m, out_pad), lambda i: (i, 0)),
        compiler_params=pltpu.CompilerParams(
            dimension_semantics=("parallel",),   # tiles are independent (v7x: 2 TCs)
            vmem_limit_bytes=vmem_limit,
        ),
        cost_estimate=cost,
    )(*operands)

    return out_padded[:batch, :out_dim]


def encoder_block_ref(x, w_t, b, negative_slope=0.2):
    """Pure-JAX reference for the deterministic (eval-mode) path."""
    y = x @ w_t + b[None, :]
    return jnp.where(y >= 0.0, y, negative_slope * y)


if __name__ == "__main__":
    # Small shapes consistent with the module: EncoderBlock(in_dim=32, out_dim=64, do_rates=0.1)
    batch, in_dim, out_dim = 16, 32, 64
    do_rates = 0.1

    key = jax.random.PRNGKey(0)
    kx, kw, kb, kd = jax.random.split(key, 4)

    x = jax.random.normal(kx, (batch, in_dim), dtype=jnp.float32)

    # Deterministic parameter init (PyTorch Linear default: U(-1/sqrt(in), 1/sqrt(in)))
    bound = 1.0 / (in_dim ** 0.5)
    w_t = jax.random.uniform(kw, (in_dim, out_dim), minval=-bound, maxval=bound,
                             dtype=jnp.float32)
    b = jax.random.uniform(kb, (out_dim,), minval=-bound, maxval=bound,
                           dtype=jnp.float32)

    # Eval-mode (dropout = identity): must match the pure-JAX reference.
    out_eval = encoder_block(x, w_t, b, drop_rate=do_rates, training=False)
    out_eval = jax.block_until_ready(out_eval)
    ref = encoder_block_ref(x, w_t, b)
    assert out_eval.shape == (batch, out_dim)
    assert jnp.allclose(out_eval, ref, atol=1e-5, rtol=1e-5), "eval-mode mismatch"

    # Training-mode (dropout mask from uint32 bits, scaled by 1/(1-p)).
    out_train = encoder_block(x, w_t, b, drop_rate=do_rates, rng_key=kd,
                              training=True)
    out_train = jax.block_until_ready(out_train)
    assert out_train.shape == (batch, out_dim)
    # dropped positions are exactly zero; kept positions equal ref / (1 - p)
    kept = out_train != 0.0
    assert jnp.allclose(jnp.where(kept, out_train, ref / (1.0 - do_rates)),
                        ref / (1.0 - do_rates), atol=1e-5, rtol=1e-5)

    print("KERNEL_OK")
</pallas_src>

<mosaic_0001>
module attributes {stable_mosaic.version = 11 : i64} {
  func.func @_encoder_block_kernel(%arg0: i32, %arg1: memref<16x128xf32, #tpu.memory_space<vmem>>, %arg2: memref<128x128xf32, #tpu.memory_space<vmem>>, %arg3: memref<1x128xf32, #tpu.memory_space<vmem>>, %arg4: memref<16x128xf32, #tpu.memory_space<vmem>>) attributes {dimension_semantics = [#tpu.dimension_semantics<parallel>], iteration_bounds = array<i64: 1>, scalar_prefetch = 0 : i64, scratch_operands = 0 : i64, tpu.core_type = #tpu.core_type<tc>, window_params = [{transform_indices = @transform_0, window_bounds = array<i64: 16, 128>}, {pipeline_mode = #tpu.pipeline_mode<synchronous>, transform_indices = @transform_1, window_bounds = array<i64: 128, 128>}, {pipeline_mode = #tpu.pipeline_mode<synchronous>, transform_indices = @transform_2, window_bounds = array<i64: 1, 128>}, {transform_indices = @transform_3, window_bounds = array<i64: 16, 128>}]} {
    %c0 = arith.constant 0 : index
    %c0_0 = arith.constant 0 : index
    %0 = vector.load %arg1[%c0, %c0_0] : memref<16x128xf32, #tpu.memory_space<vmem>>, vector<16x128xf32>
    %c0_1 = arith.constant 0 : index
    %c0_2 = arith.constant 0 : index
    %1 = vector.load %arg2[%c0_1, %c0_2] : memref<128x128xf32, #tpu.memory_space<vmem>>, vector<128x128xf32>
    %cst = arith.constant dense<0.000000e+00> : vector<16x128xf32>
    %2 = tpu.matmul %0, %1, %cst {dimension_numbers = #tpu.dot_dimension_numbers<[1], [0], [0], [1], [0, 0, 1, 1], [], []>} : vector<16x128xf32>, vector<128x128xf32>, vector<16x128xf32> -> vector<16x128xf32>
    %c0_3 = arith.constant 0 : index
    %c0_4 = arith.constant 0 : index
    %3 = vector.load %arg3[%c0_3, %c0_4] : memref<1x128xf32, #tpu.memory_space<vmem>>, vector<1x128xf32>
    %4 = vector.broadcast %3 : vector<1x128xf32> to vector<16x128xf32>
    %5 = arith.addf %2, %4 : vector<16x128xf32>
    %cst_5 = arith.constant 0.000000e+00 : f32
    %6 = vector.broadcast %cst_5 : f32 to vector<16x128xf32>
    %7 = arith.cmpf oge, %5, %6 : vector<16x128xf32>
    %cst_6 = arith.constant 2.000000e-01 : f32
    %8 = vector.broadcast %cst_6 : f32 to vector<16x128xf32>
    %9 = arith.mulf %8, %5 : vector<16x128xf32>
    %10 = arith.select %7, %5, %9 : vector<16x128xi1>, vector<16x128xf32>
    %c0_7 = arith.constant 0 : index
    %c0_8 = arith.constant 0 : index
    %11 = vector.load %arg4[%c0_7, %c0_8] : memref<16x128xf32, #tpu.memory_space<vmem>>, vector<16x128xf32>
    tpu.vector_store %arg4[%c0_7, %c0_8], %10 {strides = array<i32>} : memref<16x128xf32, #tpu.memory_space<vmem>>, vector<16x128xf32>,
    return
  }
  func.func @transform_0(%arg0: i32) -> (i32, i32) {
    %c0_i32 = arith.constant 0 : i32
    %c0_i32_0 = arith.constant 0 : i32
    return %arg0, %c0_i32 : i32, i32
  }
  func.func @transform_1(%arg0: i32) -> (i32, i32) {
    %c0_i32 = arith.constant 0 : i32
    %c0_i32_0 = arith.constant 0 : i32
    %c0_i32_1 = arith.constant 0 : i32
    return %c0_i32, %c0_i32_0 : i32, i32
  }
  func.func @transform_2(%arg0: i32) -> (i32, i32) {
    %c0_i32 = arith.constant 0 : i32
    %c0_i32_0 = arith.constant 0 : i32
    %c0_i32_1 = arith.constant 0 : i32
    return %c0_i32, %c0_i32_0 : i32, i32
  }
  func.func @transform_3(%arg0: i32) -> (i32, i32) {
    %c0_i32 = arith.constant 0 : i32
    %c0_i32_0 = arith.constant 0 : i32
    return %arg0, %c0_i32 : i32, i32
  }
}

</mosaic_0001>

<llo_original>
// kernel: tpu_custom_call.1
$region0: #{tpu_custom_call.1}
  #allocation0 [shape = 'u32[]', space=smem, size = 0x4, offset = 0x4, fixed_abs, tag = 'smem constant byte address 0x4 - core index']
  #allocation1 [shape = 'u32[144,128]{1,0:T(1,128)}', space=vmem, size = 0x12000, scoped, tag = 'internal scratch']
  %s0 = inlined_call_operand.hbm [shape: f32[16,128], index: 0, kind: input, shape index: {}]
  %s1 = inlined_call_operand.hbm [shape: f32[128,128], index: 1, kind: input, shape index: {}]
  %s2 = inlined_call_operand.vmem [shape: f32[1,128], index: 2, kind: input, shape index: {}]
  %s3 = inlined_call_operand.hbm [shape: f32[16,128], index: 3, kind: output, shape index: {}]
  %s4 = sld [smem:[#allocation0]]
  $region30: #{tpu_custom_call.1} parent=0
    _
  %s6 = ssub.s32 1, %s4
  %s7 = scalar_select 0, %s6, %s4
  $region1: #{tpu_custom_call.1} parent=0
    #allocation2 [shape = 'u8[8192]{0}', space=vmem, size = 0x2000, scoped, tag = 'input window, operand 0, single buffered']
    #allocation3 [shape = 's32[1]{0}', space=sflag, size = 0x4, scoped, tag = 'scoped memory for tpu_custom_call.1']
    #allocation4 [shape = 's32[1]{0}', space=sflag, size = 0x4, scoped, tag = 'scoped memory for tpu_custom_call.1']
    #allocation5 [shape = 'u8[65536]{0}', space=vmem, size = 0x10000, scoped, tag = 'input window, operand 1, single buffered']
    #allocation6 [shape = 's32[1]{0}', space=sflag, size = 0x4, scoped, tag = 'scoped memory for tpu_custom_call.1']
    #allocation7 [shape = 'u8[8192]{0}', space=vmem, size = 0x2000, scoped, tag = 'output window, operand 0, single buffered']
    %8 = vsyncpa [#allocation3], 0
    %9 = vsyncpa [#allocation6], 0
    %10 = vsyncpa [#allocation4], 0
    // Predicated region
    $region2: #{tpu_custom_call.1} parent=1 // pred_check
      _
    $region3: #{tpu_custom_call.1} parent=1 // pred_check_branch
      %12 = sbr.rel (0) target = $region5
    $region4: #{tpu_custom_call.1} parent=1 // pred_region
      %s14 = ssub.s32 256, 256
      %15 = vsyncadd [#allocation3], %s14
      %s16 = sshll.u32 [#allocation2], 4
      %s17 = int_to_ptr.vmem [resolvable:$true] %s16
      %22 = dma.hbm_to_vmem [thread:$0]  %s0, 256, %s17, [#allocation3], 128, 128, 8
    $region5: #{tpu_custom_call.1} parent=1 // pred_fallthru
      _
    // Predicated region
    $region6: #{tpu_custom_call.1} parent=1 // pred_check
      _
    $region7: #{tpu_custom_call.1} parent=1 // pred_check_branch
      %24 = sbr.rel (0) target = $region9
    $region8: #{tpu_custom_call.1} parent=1 // pred_region
      %s26 = ssub.s32 2048, 2048
      %27 = vsyncadd [#allocation6], %s26
      %s28 = sshll.u32 [#allocation5], 4
      %s29 = int_to_ptr.vmem [resolvable:$true] %s28
      %34 = dma.hbm_to_vmem [thread:$0]  %s1, 2048, %s29, [#allocation6], 128, 128, 8
    $region9: #{tpu_custom_call.1} parent=1 // pred_fallthru
      _
    // Predicated region
    $region10: #{tpu_custom_call.1} parent=1 // pred_check
      _
    $region11: #{tpu_custom_call.1} parent=1 // pred_check_branch
      %36 = sbr.rel (0) target = $region13
    $region12: #{tpu_custom_call.1} parent=1 // pred_region
      _
    $region13: #{tpu_custom_call.1} parent=1 // pred_fallthru
      _
    // Predicated region
    $region14: #{tpu_custom_call.1} parent=1 // pred_check
      _
    $region15: #{tpu_custom_call.1} parent=1 // pred_check_branch
      %38 = sbr.rel (0) target = $region17
    $region16: #{tpu_custom_call.1} parent=1 // pred_region
      %39 = dma.done [#allocation3], 256
    $region17: #{tpu_custom_call.1} parent=1 // pred_fallthru
      _
    // Predicated region
    $region18: #{tpu_custom_call.1} parent=1 // pred_check
      _
    $region19: #{tpu_custom_call.1} parent=1 // pred_check_branch
      %41 = sbr.rel (0) target = $region21
    $region20: #{tpu_custom_call.1} parent=1 // pred_region
      %42 = dma.done [#allocation6], 2048
    $region21: #{tpu_custom_call.1} parent=1 // pred_fallthru
      _
    %v43 = vld [vmem:[#allocation2] sm:$0xff]
    %v44 = vld [vmem:[#allocation2 + $0x8] sm:$0xff]
    %v45 = vld [vmem:[#allocation5] sm:$0xff]
    %v46 = vld [vmem:[#allocation5 + $0x8] sm:$0xff]
    %v47 = vld [vmem:[#allocation5 + $0x10] sm:$0xff]
    %v48 = vld [vmem:[#allocation5 + $0x18] sm:$0xff]
    %v49 = vld [vmem:[#allocation5 + $0x20] sm:$0xff]
    %v50 = vld [vmem:[#allocation5 + $0x28] sm:$0xff]
    %v51 = vld [vmem:[#allocation5 + $0x30] sm:$0xff]
    %v52 = vld [vmem:[#allocation5 + $0x38] sm:$0xff]
    %v53 = vld [vmem:[#allocation5 + $0x40] sm:$0xff]
    %v54 = vld [vmem:[#allocation5 + $0x48] sm:$0xff]
    %v55 = vld [vmem:[#allocation5 + $0x50] sm:$0xff]
    %v56 = vld [vmem:[#allocation5 + $0x58] sm:$0xff]
    %v57 = vld [vmem:[#allocation5 + $0x60] sm:$0xff]
    %v58 = vld [vmem:[#allocation5 + $0x68] sm:$0xff]
    %v59 = vld [vmem:[#allocation5 + $0x70] sm:$0xff]
    %v60 = vld [vmem:[#allocation5 + $0x78] sm:$0xff]
    %v61 = vld [vmem:[%s2] sm:$0x1]
    %v63 = vlaneseq
    %v64 = vshrl.u32 %v63, 7
    %v65 = vsub.s32 0, %v64
    %v66 = vrot.slane %v61, %v65
    %68 = vmatprep.subr.mxu0 0.0
    %69 = vmatpush1.msra.mxu0 %v45
    %70 = vmatprep.subr.mxu0 0.0
    %71 = vmatpush1.msra.mxu0 %v46
    %72 = vmatprep.subr.mxu0 0.0
    %73 = vmatpush1.msra.mxu0 %v47
    %74 = vmatprep.subr.mxu0 0.0
    %75 = vmatpush1.msra.mxu0 %v48
    %76 = vmatprep.subr.mxu0 0.0
    %77 = vmatpush1.msra.mxu0 %v49
    %78 = vmatprep.subr.mxu0 0.0
    %79 = vmatpush1.msra.mxu0 %v50
    %80 = vmatprep.subr.mxu0 0.0
    %81 = vmatpush1.msra.mxu0 %v51
    %82 = vmatprep.subr.mxu0 0.0
    %83 = vmatpush1.msra.mxu0 %v52
    %84 = vmatprep.subr.mxu0 0.0
    %85 = vmatpush1.msra.mxu0 %v53
    %86 = vmatprep.subr.mxu0 0.0
    %87 = vmatpush1.msra.mxu0 %v54
    %88 = vmatprep.subr.mxu0 0.0
    %89 = vmatpush1.msra.mxu0 %v55
    %90 = vmatprep.subr.mxu0 0.0
    %91 = vmatpush1.msra.mxu0 %v56
    %92 = vmatprep.subr.mxu0 0.0
    %93 = vmatpush1.msra.mxu0 %v57
    %94 = vmatprep.subr.mxu0 0.0
    %95 = vmatpush1.msra.mxu0 %v58
    %96 = vmatprep.subr.mxu0 0.0
    %97 = vmatpush1.msra.mxu0 %v59
    %98 = vmatprep.subr.mxu0 0.0
    %99 = vmatpush1.msra.mxu0 %v60
    %100 = vmatprep.subr.mxu0 0.0
    %101 = vmatpush1.msra.mxu0 0.0
    %102 = vmatprep.subr.mxu0 0.0
    %103 = vmatpush1.msra.mxu0 0.0
    %104 = vmatprep.subr.mxu0 0.0
    %105 = vmatpush1.msra.mxu0 0.0
    %106 = vmatprep.subr.mxu0 0.0
    %107 = vmatpush1.msra.mxu0 0.0
    %108 = vmatprep.subr.mxu0 0.0
    %109 = vmatpush1.msra.mxu0 0.0
    %110 = vmatprep.subr.mxu0 0.0
    %111 = vmatpush1.msra.mxu0 0.0
    %112 = vmatprep.subr.mxu0 0.0
    %113 = vmatpush1.msra.mxu0 0.0
    %114 = vmatprep.subr.mxu0 0.0
    %115 = vmatpush1.msra.mxu0 0.0
    %116 = vmatprep.subr.mxu0 0.0
    %117 = vmatpush1.msra.mxu0 0.0
    %118 = vmatprep.subr.mxu0 0.0
    %119 = vmatpush1.msra.mxu0 0.0
    %120 = vmatprep.subr.mxu0 0.0
    %121 = vmatpush1.msra.mxu0 0.0
    %122 = vmatprep.subr.mxu0 0.0
    %123 = vmatpush1.msra.mxu0 0.0
    %124 = vmatprep.subr.mxu0 0.0
    %125 = vmatpush1.msra.mxu0 0.0
    %126 = vmatprep.subr.mxu0 0.0
    %127 = vmatpush1.msra.mxu0 0.0
    %128 = vmatprep.subr.mxu0 0.0
    %129 = vmatpush1.msra.mxu0 0.0
    %130 = vmatprep.subr.mxu0 0.0
    %131 = vmatpush1.msra.mxu0 0.0
    %132 = vmatprep.mubr.f32.mxu0 0.0
    %133 = vmatmul.mubr.f32.gmra.mrb[0].mxu0 %v43
    %v134 = vpop.f32.mrb[0].mxu0
    %v135 = vadd.f32 %v66, %v134
    %v136 = vpop.f32.mrb[0].mxu0
    %137 = vmatprep.mubr.f32.mxu0 0.0
    %138 = vmatmul.mubr.f32.gmra.mrb[0].mxu0 %v44
    %v139 = vpop.f32.mrb[0].mxu0
    %v140 = vadd.f32 %v66, %v139
    %v141 = vpop.f32.mrb[0].mxu0
    %142 = vdwg.mxu0
    %vm143 = vcmp.ge.f32.partialorder %v135, 0.0
    %vm144 = vcmp.ge.f32.partialorder %v140, 0.0
    %v145 = vmul.f32 %v135, 0.2
    %v146 = vmul.f32 %v140, 0.2
    %v147 = vsel %vm143, %v135, %v145
    %v148 = vsel %vm144, %v140, %v146
    %149 = vst [vmem:[#allocation7] sm:$0xff] %v147
    %150 = vst [vmem:[#allocation7 + $0x8] sm:$0xff] %v148
    // Predicated region
    $region22: #{tpu_custom_call.1} parent=1 // pred_check
      _
    $region23: #{tpu_custom_call.1} parent=1 // pred_check_branch
      %152 = sbr.rel (0) target = $region25
    $region24: #{tpu_custom_call.1} parent=1 // pred_region
      %s154 = ssub.s32 256, 256
      %155 = vsyncadd [#allocation4], %s154
      %s156 = sshll.u32 [#allocation7], 4
      %s157 = int_to_ptr.vmem [resolvable:$true] %s156
      %162 = dma.vmem_to_hbm [thread:$0]  %s157, 256, %s3, [#allocation4], 128, 128, 8
    $region25: #{tpu_custom_call.1} parent=1 // pred_fallthru
      _
    // Predicated region
    $region26: #{tpu_custom_call.1} parent=1 // pred_check
      _
    $region27: #{tpu_custom_call.1} parent=1 // pred_check_branch
      %164 = sbr.rel (0) target = $region29
    $region28: #{tpu_custom_call.1} parent=1 // pred_region
      %165 = dma.done [#allocation4], 256
    $region29: #{tpu_custom_call.1} parent=1 // pred_fallthru
      _
    %166 = vsyncpa [#allocation3], 1
    %167 = vsyncpa [#allocation6], 1
    %168 = vsyncpa [#allocation4], 1

</llo_original>
